<compile_context>
chip_gen: v7x
topology: tpu7x:2x2x1
jax: 0.10.0
libtpu: 0.0.40
codegen_flags: <defaults>
</compile_context>

<pallas_src>
import functools

import jax
import jax.numpy as jnp
from jax import lax
from jax.experimental import pallas as pl
from jax.experimental.pallas import tpu as pltpu


def _ce_kernel(logits_ref, targets_ref, out_ref,
               m_ref, se_ref, sx_ref, st_ref, *,
               epsilon, n_classes, n_valid, tile_batch, tile_c, mask_lanes):
    i = pl.program_id(0)          # row-tile index ("parallel")
    k = pl.program_id(1)          # class-tile index ("arbitrary", reduction carry)
    nk = pl.num_programs(1)

    @pl.when(k == 0)
    def _():
        m_ref[...] = jnp.full_like(m_ref, -jnp.inf)
        se_ref[...] = jnp.zeros_like(se_ref)
        sx_ref[...] = jnp.zeros_like(sx_ref)
        st_ref[...] = jnp.zeros_like(st_ref)

    x = logits_ref[...]                        # (TB, TC) native dtype; no eager f32 tile copy
    t = targets_ref[...]                       # (TB, 1) int32

    cls = k * tile_c + lax.broadcasted_iota(jnp.int32, x.shape, 1)   # global class ids

    if mask_lanes:
        # Ragged last class tile: neutralize padded lanes (-inf for max/exp, 0 for plain sum).
        lane_ok = cls < n_classes
        xm = jnp.where(lane_ok, x, jnp.array(-jnp.inf, dtype=x.dtype))
        xs = jnp.where(lane_ok, x, jnp.array(0, dtype=x.dtype))
    else:
        xm = x
        xs = x

    # Online (streaming) softmax statistics, carried in f32 scratch across class tiles.
    m_old = m_ref[...]
    m_loc = jnp.max(xm, axis=-1, keepdims=True).astype(jnp.float32)
    m_new = jnp.maximum(m_old, m_loc)

    se_new = (se_ref[...] * jnp.exp(m_old - m_new)
              + jnp.sum(jnp.exp(xm.astype(jnp.float32) - m_new), axis=-1, keepdims=True))
    sx_new = sx_ref[...] + jnp.sum(xs.astype(jnp.float32), axis=-1, keepdims=True)
    st_new = st_ref[...] + jnp.sum(
        jnp.where(cls == t, x, jnp.array(0, dtype=x.dtype)).astype(jnp.float32),
        axis=-1, keepdims=True)

    m_ref[...] = m_new
    se_ref[...] = se_new
    sx_ref[...] = sx_new
    st_ref[...] = st_new

    @pl.when(k == nk - 1)
    def _():
        lse = jnp.log(se_new) + m_new                                   # (TB, 1)
        # (1-eps)*(-logp[target]) - eps*mean_c(logp)
        #    == (1-eps)*(lse - x[target]) - eps*(sum_c(x)/C - lse)
        per_row = ((1.0 - epsilon) * (lse - st_new)
                   - epsilon * (sx_new * (1.0 / n_classes) - lse))
        # Mask padded rows of a ragged last row tile (garbage/NaN is selected away per-row).
        row_ids = i * tile_batch + lax.broadcasted_iota(jnp.int32, per_row.shape, 0)
        per_row = jnp.where(row_ids < n_valid, per_row, 0.0)
        partial = jnp.sum(per_row)
        # Full 8x128-aligned, lane-dense store (value replicated; wrapper reads [:, 0, 0]).
        out_ref[...] = jnp.broadcast_to(partial, out_ref.shape).astype(jnp.float32)


def _round_up(x, m):
    return ((x + m - 1) // m) * m


def _pick_tiles(n, c, itemsize, budget):
    """Pick (tile_batch, tile_c) from a VMEM budget.

    Per-element model: double-buffered input (2*itemsize) + ~4 f32-equivalent live
    temporaries (iota, shifted/exp, selects). Per-row constants: (TB,1) int32 targets tile
    lane-padded to 128 and double-buffered, plus four (TB,1) f32 scratch accumulators.
    """
    row_const = 2 * 128 * 4 + 4 * 128 * 4
    per_col = 2 * itemsize + 4 * 4

    if n <= 8:
        return max(1, n), c

    c_pad = max(128, _round_up(c, 128))

    # Preferred: a single full-C tile (one reduction pass, trivial online-softmax carry).
    tb = budget // (c_pad * per_col + row_const)
    if tb >= 64:
        tb = min(int(tb), 1024)                                  # 512-1024 rows ~= HBM roofline
        tb = min(tb, max(8, _round_up(pl.cdiv(n, 4), 8)))        # keep >= ~4 grid steps
        tb = max(8, (min(tb, _round_up(n, 8)) // 8) * 8)
        return tb, c

    # Huge vocab (bites hardest on v7x's 64 MiB VMEM): tile the class dimension instead.
    tb = min(256, max(8, _round_up(pl.cdiv(n, 4), 8)))
    tb = max(8, (min(tb, _round_up(n, 8)) // 8) * 8)
    tc = (budget // tb - row_const) // per_col
    tc = max(128, (int(tc) // 128) * 128)
    tc = min(tc, c_pad)
    return tb, tc


def cross_entropy_loss(logits, targets, *, epsilon=0.1, tile_batch=None, tile_c=None):
    """logits: [N, C] float (f32 or bf16), targets: [N] int -> scalar float32."""
    n, c = logits.shape
    targets2d = targets.astype(jnp.int32).reshape(n, 1)

    # Per-generation VMEM sizing (v7x: 64 MiB per TC, v5e/v6e: 128 MiB). Conservative fallback.
    try:
        vmem_cap = int(pltpu.get_tpu_info().vmem_capacity_bytes)
    except Exception:
        vmem_cap = 64 * 1024 * 1024
    vmem_limit = int(vmem_cap * 0.75)
    tile_budget = int(vmem_cap * 0.60)

    auto_tb, auto_tc = _pick_tiles(n, c, jnp.dtype(logits.dtype).itemsize, tile_budget)
    if tile_batch is None:
        tile_batch = auto_tb
    if tile_c is None:
        tile_c = auto_tc

    num_row_tiles = pl.cdiv(n, tile_batch)
    num_c_tiles = pl.cdiv(c, tile_c)
    mask_lanes = (c % tile_c) != 0

    kernel = functools.partial(
        _ce_kernel,
        epsilon=float(epsilon),
        n_classes=int(c),
        n_valid=int(n),
        tile_batch=int(tile_batch),
        tile_c=int(tile_c),
        mask_lanes=bool(mask_lanes),
    )

    partials = pl.pallas_call(
        kernel,
        out_shape=jax.ShapeDtypeStruct((num_row_tiles, 8, 128), jnp.float32),
        grid_spec=pltpu.PrefetchScalarGridSpec(
            num_scalar_prefetch=0,
            grid=(num_row_tiles, num_c_tiles),
            in_specs=[
                pl.BlockSpec((tile_batch, tile_c), lambda i, k: (i, k)),
                pl.BlockSpec((tile_batch, 1), lambda i, k: (i, 0)),
            ],
            out_specs=pl.BlockSpec((1, 8, 128), lambda i, k: (i, 0, 0)),
            scratch_shapes=[pltpu.VMEM((tile_batch, 1), jnp.float32)] * 4,
        ),
        compiler_params=pltpu.CompilerParams(
            dimension_semantics=("parallel", "arbitrary"),
            vmem_limit_bytes=vmem_limit,
        ),
    )(logits, targets2d)

    # Final reduction + mean outside the kernel (tiny; keeps the row axis fully parallel).
    return jnp.sum(partials[:, 0, 0]) / jnp.float32(n)


def _reference(logits, targets, epsilon=0.1):
    logp = jax.nn.log_softmax(logits.astype(jnp.float32), axis=-1)
    loss = -jnp.take_along_axis(logp, targets[:, None], axis=-1)[:, 0]
    return jnp.mean((1.0 - epsilon) * loss - epsilon * jnp.mean(logp, axis=-1))


if __name__ == "__main__":
    key = jax.random.PRNGKey(0)
    k1, k2, k3, k4, k5, k6 = jax.random.split(key, 6)

    # 1) Small shape consistent with the module: 16 rows, 32 classes, f32, auto tiling.
    N, C = 16, 32
    logits = jax.random.normal(k1, (N, C), dtype=jnp.float32)
    targets = jax.random.randint(k2, (N,), 0, C, dtype=jnp.int32)
    loss = jax.block_until_ready(cross_entropy_loss(logits, targets, epsilon=0.1))
    ref = _reference(logits, targets, epsilon=0.1)
    assert jnp.allclose(loss, ref, atol=1e-5, rtol=1e-5), (loss, ref)

    # 2) Ragged rows, multiple row tiles (exercises the row mask + parallel partial sums).
    N2, C2 = 30, 32
    logits2 = jax.random.normal(k3, (N2, C2), dtype=jnp.float32)
    targets2 = jax.random.randint(k4, (N2,), 0, C2, dtype=jnp.int32)
    loss2 = jax.block_until_ready(
        cross_entropy_loss(logits2, targets2, epsilon=0.1, tile_batch=8))
    ref2 = _reference(logits2, targets2, epsilon=0.1)
    assert jnp.allclose(loss2, ref2, atol=1e-5, rtol=1e-5), (loss2, ref2)

    # 3) Class-tiled path with a ragged last class tile (online-softmax carry + lane mask).
    N3, C3 = 24, 160
    logits3 = jax.random.normal(k5, (N3, C3), dtype=jnp.float32)
    targets3 = jax.random.randint(k6, (N3,), 0, C3, dtype=jnp.int32)
    loss3 = jax.block_until_ready(
        cross_entropy_loss(logits3, targets3, epsilon=0.1, tile_batch=8, tile_c=128))
    ref3 = _reference(logits3, targets3, epsilon=0.1)
    assert jnp.allclose(loss3, ref3, atol=1e-5, rtol=1e-5), (loss3, ref3)

    # 4) bf16 logits: native-dtype reductions, no eager f32 tile copy.
    logits4 = logits.astype(jnp.bfloat16)
    loss4 = jax.block_until_ready(cross_entropy_loss(logits4, targets, epsilon=0.1))
    ref4 = _reference(logits4.astype(jnp.float32), targets, epsilon=0.1)
    assert jnp.allclose(loss4, ref4, atol=1e-4, rtol=1e-4), (loss4, ref4)

    print("KERNEL_OK")
</pallas_src>

<mosaic_0001>
module attributes {stable_mosaic.version = 11 : i64} {
  func.func @_ce_kernel(%arg0: i32, %arg1: i32, %arg2: memref<8x32xf32, #tpu.memory_space<vmem>>, %arg3: memref<8x1xi32, #tpu.memory_space<vmem>>, %arg4: memref<1x8x128xf32, #tpu.memory_space<vmem>>, %arg5: memref<8x1xf32, #tpu.memory_space<vmem>>, %arg6: memref<8x1xf32, #tpu.memory_space<vmem>>, %arg7: memref<8x1xf32, #tpu.memory_space<vmem>>, %arg8: memref<8x1xf32, #tpu.memory_space<vmem>>) attributes {dimension_semantics = [#tpu.dimension_semantics<parallel>, #tpu.dimension_semantics<arbitrary>], iteration_bounds = array<i64: 2, 1>, scalar_prefetch = 0 : i64, scratch_operands = 4 : i64, tpu.core_type = #tpu.core_type<tc>, window_params = [{transform_indices = @transform_0, window_bounds = array<i64: 8, 32>}, {transform_indices = @transform_1, window_bounds = array<i64: 8, 1>}, {transform_indices = @transform_2, window_bounds = array<i64: 1, 8, 128>}]} {
    %c0_i32 = arith.constant 0 : i32
    %0 = arith.cmpi eq, %arg1, %c0_i32 : i32
    %1 = arith.extui %0 : i1 to i32
    %c0_i32_0 = arith.constant 0 : i32
    %2 = arith.cmpi ne, %1, %c0_i32_0 : i32
    scf.if %2 {
      %cst_26 = arith.constant 0xFF800000 : f32
      %42 = vector.broadcast %cst_26 : f32 to vector<8x1xf32>
      %c0_27 = arith.constant 0 : index
      %c0_28 = arith.constant 0 : index
      %43 = vector.load %arg5[%c0_27, %c0_28] : memref<8x1xf32, #tpu.memory_space<vmem>>, vector<8x1xf32>
      tpu.vector_store %arg5[%c0_27, %c0_28], %42 {strides = array<i32>} : memref<8x1xf32, #tpu.memory_space<vmem>>, vector<8x1xf32>,
      %cst_29 = arith.constant 0.000000e+00 : f32
      %44 = vector.broadcast %cst_29 : f32 to vector<8x1xf32>
      %c0_30 = arith.constant 0 : index
      %c0_31 = arith.constant 0 : index
      %45 = vector.load %arg6[%c0_30, %c0_31] : memref<8x1xf32, #tpu.memory_space<vmem>>, vector<8x1xf32>
      tpu.vector_store %arg6[%c0_30, %c0_31], %44 {strides = array<i32>} : memref<8x1xf32, #tpu.memory_space<vmem>>, vector<8x1xf32>,
      %cst_32 = arith.constant 0.000000e+00 : f32
      %46 = vector.broadcast %cst_32 : f32 to vector<8x1xf32>
      %c0_33 = arith.constant 0 : index
      %c0_34 = arith.constant 0 : index
      %47 = vector.load %arg7[%c0_33, %c0_34] : memref<8x1xf32, #tpu.memory_space<vmem>>, vector<8x1xf32>
      tpu.vector_store %arg7[%c0_33, %c0_34], %46 {strides = array<i32>} : memref<8x1xf32, #tpu.memory_space<vmem>>, vector<8x1xf32>,
      %cst_35 = arith.constant 0.000000e+00 : f32
      %48 = vector.broadcast %cst_35 : f32 to vector<8x1xf32>
      %c0_36 = arith.constant 0 : index
      %c0_37 = arith.constant 0 : index
      %49 = vector.load %arg8[%c0_36, %c0_37] : memref<8x1xf32, #tpu.memory_space<vmem>>, vector<8x1xf32>
      tpu.vector_store %arg8[%c0_36, %c0_37], %48 {strides = array<i32>} : memref<8x1xf32, #tpu.memory_space<vmem>>, vector<8x1xf32>,
    } else {
    }
    %c0 = arith.constant 0 : index
    %c0_1 = arith.constant 0 : index
    %3 = vector.load %arg2[%c0, %c0_1] : memref<8x32xf32, #tpu.memory_space<vmem>>, vector<8x32xf32>
    %c0_2 = arith.constant 0 : index
    %c0_3 = arith.constant 0 : index
    %4 = vector.load %arg3[%c0_2, %c0_3] : memref<8x1xi32, #tpu.memory_space<vmem>>, vector<8x1xi32>
    %c32_i32 = arith.constant 32 : i32
    %5 = arith.muli %arg1, %c32_i32 : i32
    %6 = tpu.iota {dimensions = array<i32: 1>} : vector<8x32xi32>
    %7 = vector.broadcast %5 : i32 to vector<8x32xi32>
    %8 = arith.addi %7, %6 : vector<8x32xi32>
    %c0_4 = arith.constant 0 : index
    %c0_5 = arith.constant 0 : index
    %9 = vector.load %arg5[%c0_4, %c0_5] : memref<8x1xf32, #tpu.memory_space<vmem>>, vector<8x1xf32>
    %cst = arith.constant dense<0xFF800000> : vector<8xf32>
    %10 = vector.multi_reduction <maximumf>, %3, %cst [1] : vector<8x32xf32> to vector<8xf32>
    %11 = vector.shape_cast %10 : vector<8xf32> to vector<8x1xf32>
    %12 = arith.maximumf %9, %11 : vector<8x1xf32>
    %c0_6 = arith.constant 0 : index
    %c0_7 = arith.constant 0 : index
    %13 = vector.load %arg6[%c0_6, %c0_7] : memref<8x1xf32, #tpu.memory_space<vmem>>, vector<8x1xf32>
    %14 = arith.subf %9, %12 : vector<8x1xf32>
    %15 = math.exp %14 : vector<8x1xf32>
    %16 = arith.mulf %13, %15 : vector<8x1xf32>
    %17 = vector.broadcast %12 : vector<8x1xf32> to vector<8x32xf32>
    %18 = arith.subf %3, %17 : vector<8x32xf32>
    %19 = math.exp %18 : vector<8x32xf32>
    %cst_8 = arith.constant dense<0.000000e+00> : vector<8xf32>
    %20 = vector.multi_reduction <add>, %19, %cst_8 [1] : vector<8x32xf32> to vector<8xf32>
    %21 = vector.shape_cast %20 : vector<8xf32> to vector<8x1xf32>
    %22 = arith.addf %16, %21 : vector<8x1xf32>
    %c0_9 = arith.constant 0 : index
    %c0_10 = arith.constant 0 : index
    %23 = vector.load %arg7[%c0_9, %c0_10] : memref<8x1xf32, #tpu.memory_space<vmem>>, vector<8x1xf32>
    %cst_11 = arith.constant dense<0.000000e+00> : vector<8xf32>
    %24 = vector.multi_reduction <add>, %3, %cst_11 [1] : vector<8x32xf32> to vector<8xf32>
    %25 = vector.shape_cast %24 : vector<8xf32> to vector<8x1xf32>
    %26 = arith.addf %23, %25 : vector<8x1xf32>
    %c0_12 = arith.constant 0 : index
    %c0_13 = arith.constant 0 : index
    %27 = vector.load %arg8[%c0_12, %c0_13] : memref<8x1xf32, #tpu.memory_space<vmem>>, vector<8x1xf32>
    %28 = vector.broadcast %4 : vector<8x1xi32> to vector<8x32xi32>
    %29 = arith.cmpi eq, %8, %28 : vector<8x32xi32>
    %cst_14 = arith.constant 0.000000e+00 : f32
    %30 = vector.broadcast %cst_14 : f32 to vector<8x32xf32>
    %31 = arith.select %29, %3, %30 : vector<8x32xi1>, vector<8x32xf32>
    %cst_15 = arith.constant dense<0.000000e+00> : vector<8xf32>
    %32 = vector.multi_reduction <add>, %31, %cst_15 [1] : vector<8x32xf32> to vector<8xf32>
    %33 = vector.shape_cast %32 : vector<8xf32> to vector<8x1xf32>
    %34 = arith.addf %27, %33 : vector<8x1xf32>
    %c0_16 = arith.constant 0 : index
    %c0_17 = arith.constant 0 : index
    %35 = vector.load %arg5[%c0_16, %c0_17] : memref<8x1xf32, #tpu.memory_space<vmem>>, vector<8x1xf32>
    tpu.vector_store %arg5[%c0_16, %c0_17], %12 {strides = array<i32>} : memref<8x1xf32, #tpu.memory_space<vmem>>, vector<8x1xf32>,
    %c0_18 = arith.constant 0 : index
    %c0_19 = arith.constant 0 : index
    %36 = vector.load %arg6[%c0_18, %c0_19] : memref<8x1xf32, #tpu.memory_space<vmem>>, vector<8x1xf32>
    tpu.vector_store %arg6[%c0_18, %c0_19], %22 {strides = array<i32>} : memref<8x1xf32, #tpu.memory_space<vmem>>, vector<8x1xf32>,
    %c0_20 = arith.constant 0 : index
    %c0_21 = arith.constant 0 : index
    %37 = vector.load %arg7[%c0_20, %c0_21] : memref<8x1xf32, #tpu.memory_space<vmem>>, vector<8x1xf32>
    tpu.vector_store %arg7[%c0_20, %c0_21], %26 {strides = array<i32>} : memref<8x1xf32, #tpu.memory_space<vmem>>, vector<8x1xf32>,
    %c0_22 = arith.constant 0 : index
    %c0_23 = arith.constant 0 : index
    %38 = vector.load %arg8[%c0_22, %c0_23] : memref<8x1xf32, #tpu.memory_space<vmem>>, vector<8x1xf32>
    tpu.vector_store %arg8[%c0_22, %c0_23], %34 {strides = array<i32>} : memref<8x1xf32, #tpu.memory_space<vmem>>, vector<8x1xf32>,
    %c0_i32_24 = arith.constant 0 : i32
    %39 = arith.cmpi eq, %arg1, %c0_i32_24 : i32
    %40 = arith.extui %39 : i1 to i32
    %c0_i32_25 = arith.constant 0 : i32
    %41 = arith.cmpi ne, %40, %c0_i32_25 : i32
    scf.if %41 {
      %42 = math.log %22 : vector<8x1xf32>
      %43 = arith.addf %42, %12 : vector<8x1xf32>
      %44 = arith.subf %43, %34 : vector<8x1xf32>
      %cst_26 = arith.constant 0.899999976 : f32
      %45 = vector.broadcast %cst_26 : f32 to vector<8x1xf32>
      %46 = arith.mulf %45, %44 : vector<8x1xf32>
      %cst_27 = arith.constant 3.125000e-02 : f32
      %47 = vector.broadcast %cst_27 : f32 to vector<8x1xf32>
      %48 = arith.mulf %26, %47 : vector<8x1xf32>
      %49 = arith.subf %48, %43 : vector<8x1xf32>
      %cst_28 = arith.constant 1.000000e-01 : f32
      %50 = vector.broadcast %cst_28 : f32 to vector<8x1xf32>
      %51 = arith.mulf %50, %49 : vector<8x1xf32>
      %52 = arith.subf %46, %51 : vector<8x1xf32>
      %c8_i32 = arith.constant 8 : i32
      %53 = arith.muli %arg0, %c8_i32 : i32
      %54 = tpu.iota {dimensions = array<i32: 0>} : vector<8x1xi32>
      %55 = vector.broadcast %53 : i32 to vector<8x1xi32>
      %56 = arith.addi %55, %54 : vector<8x1xi32>
      %c16_i32 = arith.constant 16 : i32
      %57 = vector.broadcast %c16_i32 : i32 to vector<8x1xi32>
      %58 = arith.cmpi slt, %56, %57 : vector<8x1xi32>
      %cst_29 = arith.constant 0.000000e+00 : f32
      %59 = vector.broadcast %cst_29 : f32 to vector<8x1xf32>
      %60 = arith.select %58, %52, %59 : vector<8x1xi1>, vector<8x1xf32>
      %61 = vector.shape_cast %60 : vector<8x1xf32> to vector<1x8x1xf32>
      %cst_30 = arith.constant dense<0.000000e+00> : vector<1xf32>
      %62 = vector.multi_reduction <add>, %61, %cst_30 [1, 2] : vector<1x8x1xf32> to vector<1xf32>
      %63 = vector.shape_cast %62 : vector<1xf32> to vector<1x1x1xf32>
      %64 = vector.extract %63[0, 0, 0] : f32 from vector<1x1x1xf32>
      %65 = vector.broadcast %64 : f32 to vector<1x8x128xf32>
      %c0_31 = arith.constant 0 : index
      %c0_32 = arith.constant 0 : index
      %c0_33 = arith.constant 0 : index
      %66 = vector.load %arg4[%c0_31, %c0_32, %c0_33] : memref<1x8x128xf32, #tpu.memory_space<vmem>>, vector<1x8x128xf32>
      tpu.vector_store %arg4[%c0_31, %c0_32, %c0_33], %65 {strides = array<i32>} : memref<1x8x128xf32, #tpu.memory_space<vmem>>, vector<1x8x128xf32>,
    } else {
    }
    return
  }
  func.func @transform_0(%arg0: i32, %arg1: i32) -> (i32, i32) {
    %c0_i32 = arith.constant 0 : i32
    return %arg0, %arg1 : i32, i32
  }
  func.func @transform_1(%arg0: i32, %arg1: i32) -> (i32, i32) {
    %c0_i32 = arith.constant 0 : i32
    %c0_i32_0 = arith.constant 0 : i32
    return %arg0, %c0_i32 : i32, i32
  }
  func.func @transform_2(%arg0: i32, %arg1: i32) -> (i32, i32, i32) {
    %c0_i32 = arith.constant 0 : i32
    %c0_i32_0 = arith.constant 0 : i32
    %c0_i32_1 = arith.constant 0 : i32
    return %arg0, %c0_i32, %c0_i32_0 : i32, i32, i32
  }
}

</mosaic_0001>

<llo_original>
// kernel: tpu_custom_call.1
$region0: #{tpu_custom_call.1}
  #allocation0 [shape = 'u32[]', space=smem, size = 0x4, offset = 0x4, fixed_abs, tag = 'smem constant byte address 0x4 - core index']
  #allocation1 [shape = 'u32[144,128]{1,0:T(1,128)}', space=vmem, size = 0x12000, scoped, tag = 'internal scratch']
  #allocation2 [shape = 'f32[8,1]{1,0:T(8,128)}', space=vmem, size = 0x1000, scoped, tag = 'scratch operand']
  #allocation3 [shape = 'f32[8,1]{1,0:T(8,128)}', space=vmem, size = 0x1000, scoped, tag = 'scratch operand']
  #allocation4 [shape = 'f32[8,1]{1,0:T(8,128)}', space=vmem, size = 0x1000, scoped, tag = 'scratch operand']
  #allocation5 [shape = 'f32[8,1]{1,0:T(8,128)}', space=vmem, size = 0x1000, scoped, tag = 'scratch operand']
  %s0 = inlined_call_operand.vmem [shape: f32[16,32], index: 0, kind: input, shape index: {}]
  %s1 = inlined_call_operand.vmem [shape: s32[16,1], index: 1, kind: input, shape index: {}]
  %s2 = inlined_call_operand.hbm [shape: f32[2,8,128], index: 2, kind: output, shape index: {}]
  %s3 = sld [smem:[#allocation0]]
  $region49: #{tpu_custom_call.1} parent=0
    _
  %s5 = ssub.s32 1, %s3
  %s6 = scalar_select 0, %s5, %s3
  $region1: #{tpu_custom_call.1} parent=0
    #allocation6 [shape = 'u8[8192]{0}', space=vmem, size = 0x2000, scoped, tag = 'output window, operand 0']
    #allocation7 [shape = 's32[2]{0}', space=sflag, size = 0x8, scoped, tag = 'scoped memory for tpu_custom_call.1']
    %7 = vsyncpa [#allocation7], 0
    %s8 = scalar_lea.sflag [#allocation7], 1
    %9 = vsyncpa %s8, 0
    loop: start=0, step=1, limit=4
    $region2: #{tpu_custom_call.1} parent=1 // loop_pre_header
      _
    $region3: #{tpu_custom_call.1} parent=1 // loop_header
      %s11 = sphi 0, %s15
      %p12 = scmp.ge.s32.totalorder %s11, 4
      %s18 = sphi 0, %s30
      %s19 = sphi 0, %s26
      %s20 = sphi 0, %s18
      %s21 = sphi 0, %s19
      %s22 = sphi 0, %s20
      %s23 = sphi 0, %s21
      %s35 = sphi 0, %s37
      %s38 = sphi 0, %s35
      %s39 = sphi 0, %s38
      %s55 = sphi 0, %s39
      %s61 = sphi 0, %s63
      %s64 = sphi 0, %s61
      %s65 = sphi 0, %s64
      %s81 = sphi 0, %s65
      %s87 = sphi 0, %s89
      %s90 = sphi 0, %s87
      %s91 = sphi 0, %s90
      %s107 = sphi 0, %s91
    $region4: #{tpu_custom_call.1} parent=1 // loop_header_branch
      %14 = sbr.rel (%p12) target = $region8
    $region5: #{tpu_custom_call.1} parent=1 // loop_body
      %s16 = ssub.s32 %s11, 1
      %s17 = ssub.s32 %s11, 2
      %s24 = sadd.s32 1, %s19
      %p25 = scmp.ge.s32.totalorder %s24, 1
      %s26 = scalar_select %p25, 0, %s24
      %s27 = sadd.s32 1, %s18
      %s28 = scalar_select %p25, %s27, %s18
      %p29 = scmp.ge.s32.totalorder %s28, 2
      %s30 = scalar_select %p29, 0, %s28
      %s31 = ssub.s32 %s18, %s30
      %s32 = ssub.s32 %s19, %s26
      %s33 = sor.u32 %s31, %s32
      %p34 = scmp.eq.s32.totalorder %s33, 0
      %s36 = sadd.s32 %s35, 1
      %s37 = scalar_select %p34, %s35, %s36
      %p40 = pneg %p34
      %p41 = scmp.eq.s32.totalorder %s11, 1
      %p42 = por %p40, %p41
      %p43 = scmp.ne.s32.totalorder %s35, %s38
      %p44 = scmp.eq.s32.totalorder %s11, 0
      %p45 = por %p43, %p44
      %p46 = scmp.ne.s32.totalorder %s35, %s38
      %p47 = scmp.eq.s32.totalorder %s16, 1
      %p48 = por %p46, %p47
      %p49 = scmp.ne.s32.totalorder %s38, %s39
      %p50 = scmp.eq.s32.totalorder %s16, 0
      %p51 = por %p49, %p50
      %p52 = scmp.ne.s32.totalorder %s38, %s39
      %p53 = scmp.eq.s32.totalorder %s17, 1
      %p54 = por %p52, %p53
      %p56 = scmp.ne.s32.totalorder %s39, %s55
      %p57 = scmp.eq.s32.totalorder %s17, 0
      %p58 = por %p56, %p57
      %s59 = ssub.s32 %s18, %s30
      %p60 = scmp.eq.s32.totalorder %s59, 0
      %s62 = sadd.s32 %s61, 1
      %s63 = scalar_select %p60, %s61, %s62
      %p66 = pneg %p60
      %p67 = scmp.eq.s32.totalorder %s11, 1
      %p68 = por %p66, %p67
      %p69 = scmp.ne.s32.totalorder %s61, %s64
      %p70 = scmp.eq.s32.totalorder %s11, 0
      %p71 = por %p69, %p70
      %p72 = scmp.ne.s32.totalorder %s61, %s64
      %p73 = scmp.eq.s32.totalorder %s16, 1
      %p74 = por %p72, %p73
      %p75 = scmp.ne.s32.totalorder %s64, %s65
      %p76 = scmp.eq.s32.totalorder %s16, 0
      %p77 = por %p75, %p76
      %p78 = scmp.ne.s32.totalorder %s64, %s65
      %p79 = scmp.eq.s32.totalorder %s17, 1
      %p80 = por %p78, %p79
      %p82 = scmp.ne.s32.totalorder %s65, %s81
      %p83 = scmp.eq.s32.totalorder %s17, 0
      %p84 = por %p82, %p83
      %s85 = ssub.s32 %s18, %s30
      %p86 = scmp.eq.s32.totalorder %s85, 0
      %s88 = sadd.s32 %s87, 1
      %s89 = scalar_select %p86, %s87, %s88
      %p92 = pneg %p86
      %p93 = scmp.eq.s32.totalorder %s11, 1
      %p94 = por %p92, %p93
      %p95 = scmp.ne.s32.totalorder %s87, %s90
      %p96 = scmp.eq.s32.totalorder %s11, 0
      %p97 = por %p95, %p96
      %p98 = scmp.ne.s32.totalorder %s87, %s90
      %p99 = scmp.eq.s32.totalorder %s16, 1
      %p100 = por %p98, %p99
      %p101 = scmp.ne.s32.totalorder %s90, %s91
      %p102 = scmp.eq.s32.totalorder %s16, 0
      %p103 = por %p101, %p102
      %p104 = scmp.ne.s32.totalorder %s90, %s91
      %p105 = scmp.eq.s32.totalorder %s17, 1
      %p106 = por %p104, %p105
      %p108 = scmp.ne.s32.totalorder %s91, %s107
      %p109 = scmp.eq.s32.totalorder %s17, 0
      %p110 = por %p108, %p109
      %p111 = scmp.le.s32.totalorder 1, %s11
      %p112 = scmp.lt.s32.totalorder %s11, 3
      %p113 = pnand %p111, %p112
      %p114 = pneg %p113
      // Predicated region
      $region9: #{tpu_custom_call.1} parent=5 // pred_check
        _
      $region10: #{tpu_custom_call.1} parent=5 // pred_check_branch
        %116 = sbr.rel (%p113) target = $region12
      $region11: #{tpu_custom_call.1} parent=5 // pred_region
        %s117 = ssub.s32 %s11, 1
      $region12: #{tpu_custom_call.1} parent=5 // pred_fallthru
        _
      %p118 = scmp.lt.s32.totalorder %s11, 2
      // Predicated region
      $region13: #{tpu_custom_call.1} parent=5 // pred_check
        %p119 = pneg %p118
      $region14: #{tpu_custom_call.1} parent=5 // pred_check_branch
        %121 = sbr.rel (%p119) target = $region16
      $region15: #{tpu_custom_call.1} parent=5 // pred_region
        // Predicated region
        $region17: #{tpu_custom_call.1} parent=15 // pred_check
          %p122 = pneg %p45
        $region18: #{tpu_custom_call.1} parent=15 // pred_check_branch
          %124 = sbr.rel (%p122) target = $region20
        $region19: #{tpu_custom_call.1} parent=15 // pred_region
          %p125 = scmp.lt.s32.totalorder %s18, 1
          %s126 = scalar_select %p125, %s18, 1
          %p127 = scmp.lt.s32.totalorder %s19, 0
          %s128 = scalar_select %p127, %s19, 0
          %s129 = sadd.s32 %s128, %s126
          %s130 = smul.addr %s129, 8
          %s131 = scalar_lea.vmem %s0, %s130
        $region20: #{tpu_custom_call.1} parent=15 // pred_fallthru
          _
        // Predicated region
        $region21: #{tpu_custom_call.1} parent=15 // pred_check
          %p132 = pneg %p71
        $region22: #{tpu_custom_call.1} parent=15 // pred_check_branch
          %134 = sbr.rel (%p132) target = $region24
        $region23: #{tpu_custom_call.1} parent=15 // pred_region
          %p135 = scmp.lt.s32.totalorder %s18, 1
          %s136 = scalar_select %p135, %s18, 1
          %s137 = smul.addr %s136, 8
          %s138 = scalar_lea.vmem %s1, %s137
        $region24: #{tpu_custom_call.1} parent=15 // pred_fallthru
          _
      $region16: #{tpu_custom_call.1} parent=5 // pred_fallthru
        _
      %p139 = scmp.le.s32.totalorder 1, %s11
      %p140 = scmp.lt.s32.totalorder %s11, 3
      %p141 = pnand %p139, %p140
      %p142 = pneg %p141
      // Predicated region
      $region25: #{tpu_custom_call.1} parent=5 // pred_check
        _
      $region26: #{tpu_custom_call.1} parent=5 // pred_check_branch
        %144 = sbr.rel (%p141) target = $region28
      $region27: #{tpu_custom_call.1} parent=5 // pred_region
        %s145 = ssub.s32 %s11, 1
        %p146 = scmp.lt.s32.totalorder %s20, 1
        %s147 = scalar_select %p146, %s20, 1
        %p148 = scmp.lt.s32.totalorder %s21, 0
        %s149 = scalar_select %p148, %s21, 0
        %s150 = sadd.s32 %s149, %s147
        %s151 = smul.addr %s150, 8
        %s152 = scalar_lea.vmem %s0, %s151
        %p153 = pneg %p51
        %p154 = pneg %p48
        %p155 = scmp.lt.s32.totalorder %s20, 1
        %s156 = scalar_select %p155, %s20, 1
        %s157 = smul.addr %s156, 8
        %s158 = scalar_lea.vmem %s1, %s157
        %p159 = pneg %p77
        %p160 = pneg %p74
        %p161 = pneg %p103
        %p162 = pneg %p100
        %s163 = sand.u32 %s90, 1
        %s164 = scalar_lea.sflag [#allocation7], %s163
        %s165 = sand.u32 %s90, 1
        %s166 = smul.addr %s165, 8
        %s167 = scalar_lea.vmem [#allocation6], %s166
        %p168 = scmp.lt.s32.totalorder %s20, 1
        %s169 = scalar_select %p168, %s20, 1
        %p170 = scmp.lt.s32.totalorder %s21, 0
        %s171 = scalar_select %p170, %s21, 0
        %s172 = sadd.s32 %s171, %s169
        %s173 = smul.addr %s172, 8
        %s174 = scalar_lea.vmem %s0, %s173
        %p175 = scmp.lt.s32.totalorder %s20, 1
        %s176 = scalar_select %p175, %s20, 1
        %s177 = smul.addr %s176, 8
        %s178 = scalar_lea.vmem %s1, %s177
        %p179 = scmp.eq.s32.totalorder %s21, 0
        // Predicated region
        $region29: #{tpu_custom_call.1} parent=27 // pred_check
          %p180 = pneg %p179
        $region30: #{tpu_custom_call.1} parent=27 // pred_check_branch
          %182 = sbr.rel (%p180) target = $region32
        $region31: #{tpu_custom_call.1} parent=27 // pred_region
          %vm183 = vcmask 7168
          %184 = vst.msk [vmem:[#allocation2] sm:$0xff] %vm183, -inf
          %185 = vst.msk [vmem:[#allocation3] sm:$0xff] %vm183, 0.0
          %186 = vst.msk [vmem:[#allocation4] sm:$0xff] %vm183, 0.0
          %187 = vst.msk [vmem:[#allocation5] sm:$0xff] %vm183, 0.0
        $region32: #{tpu_custom_call.1} parent=27 // pred_fallthru
          _
        %v188 = vld [vmem:[%s174] sm:$0xff]
        %v189 = vld [vmem:[%s178] sm:$0xff]
        %s190 = smul.u32 %s21, 32
        %v191 = vlaneseq
        %v192 = vand.u32 %v191, 127
        %v193 = vstv %s190
        %v194 = vadd.s32 %v193, %v192
        %v195 = vld [vmem:[#allocation2] sm:$0xff]
        %vm196 = vcmask 261120
        %v197 = vsel %vm196, %v188, -inf
        %198 = vmax.xlane.f32.xlu0 %v197
        %v199 = vpop.xlane.xlu0 %198
        %v200 = vmax.f32 %v195, %v199
        %v201 = vld [vmem:[#allocation3] sm:$0xff]
        %v202 = vsub.f32 %v195, %v200
        %v203 = vmul.f32 %v202, 1.442695
        %v204 = vpow.pop %v203
        %v205 = vmul.f32 %v201, %v204
        %207 = vset.pattern.permute.xlu0 0
        %208 = vperm.xlu0 %207, %v200
        %v209 = vpop.permute.xlu0 %208
        %v211 = vsub.f32 %v188, %v209
        %v212 = vmul.f32 %v211, 1.442695
        %v213 = vpow.pop %v212
        %v214 = vsel %vm196, %v213, 0.0
        %215 = vadd.xlane.f32.xlu0 %v214
        %v216 = vpop.xlane.xlu0 %215
        %v217 = vadd.f32 %v205, %v216
        %v218 = vld [vmem:[#allocation4] sm:$0xff]
        %v219 = vsel %vm196, %v188, 0.0
        %220 = vadd.xlane.f32.xlu0 %v219
        %v221 = vpop.xlane.xlu0 %220
        %v222 = vadd.f32 %v218, %v221
        %v223 = vld [vmem:[#allocation5] sm:$0xff]
        %224 = vset.pattern.permute.xlu0 0
        %225 = vperm.xlu0 %224, %v189
        %v226 = vpop.permute.xlu0 %225
        %vm227 = vcmp.eq.s32.totalorder %v194, %v226
        %v228 = vsel %vm227, %v188, 0.0
        %v229 = vsel %vm196, %v228, 0.0
        %230 = vadd.xlane.f32.xlu0 %v229
        %v231 = vpop.xlane.xlu0 %230
        %v232 = vadd.f32 %v223, %v231
        %vm233 = vcmask 7168
        %234 = vst.msk [vmem:[#allocation2] sm:$0xff] %vm233, %v200
        %235 = vst.msk [vmem:[#allocation3] sm:$0xff] %vm233, %v217
        %236 = vst.msk [vmem:[#allocation4] sm:$0xff] %vm233, %v222
        %237 = vst.msk [vmem:[#allocation5] sm:$0xff] %vm233, %v232
        // Predicated region
        $region33: #{tpu_custom_call.1} parent=27 // pred_check
          %p238 = pneg %p179
        $region34: #{tpu_custom_call.1} parent=27 // pred_check_branch
          %240 = sbr.rel (%p238) target = $region36
        $region35: #{tpu_custom_call.1} parent=27 // pred_region
          %v241 = vlog2.pop %v217
          %v242 = vmul.f32 %v241, 0.6931472
          %v243 = vadd.f32 %v242, %v200
          %v244 = vsub.f32 %v243, %v232
          %v245 = vmul.f32 %v244, 0.9
          %v246 = vmul.f32 %v222, 0.03125
          %v247 = vsub.f32 %v246, %v243
          %v248 = vmul.f32 %v247, 0.1
          %v249 = vsub.f32 %v245, %v248
          %s250 = smul.u32 %s20, 8
          %v251 = vlaneseq
          %v252 = vshrl.u32 %v251, 7
          %v253 = vstv %s250
          %v254 = vadd.s32 %v253, %v252
          %vm255 = vcmp.lt.s32.totalorder %v254, 16
          %v256 = vsel %vm255, %v249, 0.0
          %v257 = vsel %vm233, %v256, 0.0
          %258 = vadd.xlane.f32.xlu0 %v257
          %v259 = vpop.xlane.xlu0 %258
          %v260 = vrot.slane %v259, 4
          %v261 = vadd.f32 %v259, %v260
          %v262 = vrot.slane %v261, 2
          %v263 = vadd.f32 %v261, %v262
          %v264 = vrot.slane %v263, 1
          %v265 = vadd.f32 %v263, %v264
          %s266 = vtos %v265
          %v267 = vstv %s266
          %268 = vst [vmem:[%s167] sm:$0xff] %v267
        $region36: #{tpu_custom_call.1} parent=27 // pred_fallthru
          _
        %s269 = sand.u32 %s90, 1
        %s270 = scalar_lea.sflag [#allocation7], %s269
        %s271 = sand.u32 %s90, 1
        %s272 = smul.addr %s271, 8
        %s273 = scalar_lea.vmem [#allocation6], %s272
        // Predicated region
        $region37: #{tpu_custom_call.1} parent=27 // pred_check
          %p274 = pneg %p100
        $region38: #{tpu_custom_call.1} parent=27 // pred_check_branch
          %276 = sbr.rel (%p274) target = $region40
        $region39: #{tpu_custom_call.1} parent=27 // pred_region
          %s278 = ssub.s32 128, 128
          %279 = vsyncadd %s270, %s278
          %s280 = smul.addr %s20, 128
          %s281 = scalar_lea.hbm %s2, %s280
          %s283 = sshll.u32 %s273, 4
          %s284 = int_to_ptr.vmem [resolvable:$true] %s283
          %286 = dma.vmem_to_hbm [thread:$0]  %s284, 128, %s281, %s270
        $region40: #{tpu_custom_call.1} parent=27 // pred_fallthru
          _
      $region28: #{tpu_custom_call.1} parent=5 // pred_fallthru
        _
      %p287 = scmp.le.s32.totalorder 2, %s11
      // Predicated region
      $region41: #{tpu_custom_call.1} parent=5 // pred_check
        %p288 = pneg %p287
      $region42: #{tpu_custom_call.1} parent=5 // pred_check_branch
        %290 = sbr.rel (%p288) target = $region44
      $region43: #{tpu_custom_call.1} parent=5 // pred_region
        %s291 = ssub.s32 %s11, 2
        // Predicated region
        $region45: #{tpu_custom_call.1} parent=43 // pred_check
          %p292 = pneg %p106
        $region46: #{tpu_custom_call.1} parent=43 // pred_check_branch
          %294 = sbr.rel (%p292) target = $region48
        $region47: #{tpu_custom_call.1} parent=43 // pred_region
          %s295 = sand.u32 %s91, 1
          %s296 = scalar_lea.sflag [#allocation7], %s295
          %s297 = sand.u32 %s91, 1
          %s298 = smul.addr %s297, 8
          %s299 = scalar_lea.vmem [#allocation6], %s298
          %300 = dma.done %s296, 128
        $region48: #{tpu_custom_call.1} parent=43 // pred_fallthru
          _
      $region44: #{tpu_custom_call.1} parent=5 // pred_fallthru
        _
    $region6: #{tpu_custom_call.1} parent=1 // loop_footer
      %s15 = sadd.s32 1, %s11
    $region7: #{tpu_custom_call.1} parent=1 // loop_footer_branch
      %10 = sbr.rel target = $region3
    $region8: #{tpu_custom_call.1} parent=1 // loop_exit
      _
    %301 = vsyncpa [#allocation7], 1
    %s302 = scalar_lea.sflag [#allocation7], 1
    %303 = vsyncpa %s302, 1

</llo_original>
